<compile_context>
chip_gen: v7x
topology: tpu7x:2x2x1
jax: 0.10.0
libtpu: 0.0.40
codegen_flags: <defaults>
</compile_context>

<pallas_src>
import jax
import jax.numpy as jnp
from jax.experimental import pallas as pl
from jax.experimental.pallas import tpu as pltpu


def _patch_embed_kernel(x_ref, w_ref, b_ref, o_ref):
    # x_ref: (1, C, TD, P)    native-layout activation tile (auto-pipelined)
    # w_ref: (C*P, dim_out)   fused, permuted weight (bf16, VMEM-resident)
    # b_ref: (1, dim_out)     f32 bias (VMEM-resident)
    # o_ref: (1, TD, dim_out)
    C = x_ref.shape[1]
    # Build the (TD, C*P) lhs (columns ordered c-outer / p-inner, matching the
    # fused weight).  Channel slices are read at point of use; the lane-axis
    # concat lands on otherwise-idle XLU/VPU slots.
    lhs = jnp.concatenate([x_ref[0, c] for c in range(C)], axis=-1)
    # Single MXU dot with K = C*P (C-fold fewer vmatmul pushes than C separate
    # K=P dots), bf16 operands, f32 accumulation.
    acc = jnp.dot(lhs.astype(w_ref.dtype), w_ref[...],
                  preferred_element_type=jnp.float32)
    o_ref[0] = (acc + b_ref[...]).astype(o_ref.dtype)


def _vmem_config():
    """Generation-aware VMEM limits.

    v5e/v6e have 128 MiB physical VMEM (scoped defaults 16/32 MiB under-tile),
    v7x has 64 MiB per TensorCore, so the limit must be capped there.
    """
    phys = 64 * 1024 * 1024  # conservative default = v7x per-TC
    try:
        phys = int(pltpu.get_tpu_info().vmem_capacity_bytes)
    except Exception:
        pass
    if phys <= 64 * 1024 * 1024:          # v7x-class
        vmem_limit = 48 * 1024 * 1024
    else:                                  # v5e / v6e (128 MiB physical)
        vmem_limit = 64 * 1024 * 1024
    tile_budget = (vmem_limit * 3) // 4    # headroom for the compiler
    return vmem_limit, tile_budget


def _choose_row_tile(B, D, C, P, dim_out, in_itemsize, out_itemsize,
                     w_itemsize, tile_budget, min_steps=8):
    """Pick TD (patch rows per grid step).

    Sublane-aligned for the actual dtypes, VMEM-budgeted (accounting for the
    128-lane padding of P), and capped so the grid keeps >= min_steps steps
    (auto-pipeline overlap + both v7x TensorCores busy) whenever that is
    legal (TD must stay a multiple of the sublane granule or equal D).
    """
    lane = 128
    # Native sublane granule of the block's second-to-last dim (TD):
    # 8 for f32, 16 for bf16, 32 for int8/fp8.
    sub = max(8, 32 // max(in_itemsize, 1), 32 // max(out_itemsize, 1))
    p_pad = pl.cdiv(P, lane) * lane
    n_pad = pl.cdiv(dim_out, lane) * lane
    kp = C * P
    # VMEM-resident weight + bias (small; would need K-tiling if this ever
    # exceeded the budget on its own).
    resident = 2 * (pl.cdiv(kp, sub) * sub) * n_pad * w_itemsize + 2 * n_pad * 4
    per_row = (2 * C * p_pad * in_itemsize    # x tile, 2 buffers, lane-padded P
               + 2 * n_pad * out_itemsize     # out tile, 2 buffers
               + n_pad * 4                    # f32 dot result in flight
               + C * p_pad * 2)               # bf16 lhs copy headroom
    td = (tile_budget - resident) // max(per_row, 1)
    td = max(int(td), sub)
    td = min(td, 2048, D)
    # Grid-collapse guard: keep at least min_steps total grid steps.
    steps_needed = -(-min_steps // max(B, 1))          # ceil(min_steps / B)
    if steps_needed > 1 and (D // steps_needed) >= sub:
        td = min(td, D // steps_needed)
    if td >= D:
        return D                                       # full extent is legal
    return max(sub, (td // sub) * sub)


def patch_embedding(x, weight, bias, patch_size, *, bf16_matmul=True,
                    min_grid_steps=8):
    """x: (B, C, L). weight: (dim_out, C*patch_size) with columns ordered
    (p outer, c inner) as in the PyTorch Rearrange. bias: (dim_out,).
    Returns (B, D, dim_out)."""
    B, C, L = x.shape
    if L % patch_size != 0:
        raise Exception("Spectra dimensions must be divisible by the patch size!")
    P = patch_size
    D = L // P
    dim_out = weight.shape[0]

    # Free reshape of the activation (no data movement).
    x4 = x.reshape(B, C, D, P)
    # Fold the (p, c) column permutation into the small weight and fuse it to a
    # single K = C*P rhs:  w_fused[c*P + p, o] = weight[o, p*C + c]
    w_dtype = jnp.bfloat16 if bf16_matmul else x.dtype
    w_fused = (jnp.transpose(weight.reshape(dim_out, P, C), (2, 1, 0))
               .reshape(C * P, dim_out).astype(w_dtype))
    b2d = bias.reshape(1, dim_out).astype(jnp.float32)

    vmem_limit, tile_budget = _vmem_config()
    TD = _choose_row_tile(B, D, C, P, dim_out,
                          x.dtype.itemsize, x.dtype.itemsize,
                          w_fused.dtype.itemsize, tile_budget,
                          min_steps=min_grid_steps)
    grid = (B, pl.cdiv(D, TD))

    itemsize = x.dtype.itemsize
    cost = pl.CostEstimate(
        flops=2 * B * D * C * P * dim_out,
        transcendentals=0,
        bytes_accessed=(B * C * L * itemsize
                        + C * P * dim_out * w_fused.dtype.itemsize
                        + dim_out * 4
                        + B * D * dim_out * itemsize),
    )

    out = pl.pallas_call(
        _patch_embed_kernel,
        out_shape=jax.ShapeDtypeStruct((B, D, dim_out), x.dtype),
        grid_spec=pltpu.PrefetchScalarGridSpec(
            num_scalar_prefetch=0,
            grid=grid,
            in_specs=[
                pl.BlockSpec((1, C, TD, P), lambda b, d: (b, 0, d, 0)),
                pl.BlockSpec((C * P, dim_out), lambda b, d: (0, 0)),
                pl.BlockSpec((1, dim_out), lambda b, d: (0, 0)),
            ],
            out_specs=pl.BlockSpec((1, TD, dim_out), lambda b, d: (b, d, 0)),
        ),
        compiler_params=pltpu.CompilerParams(
            dimension_semantics=("parallel", "parallel"),
            vmem_limit_bytes=vmem_limit,
        ),
        cost_estimate=cost,
    )(x4, w_fused, b2d)

    return out


def reference_patch_embedding(x, weight, bias, patch_size):
    B, C, L = x.shape
    D = L // patch_size
    xp = x.reshape(B, C, D, patch_size)
    xp = jnp.transpose(xp, (0, 2, 3, 1)).reshape(B, D, patch_size * C)
    return xp @ weight.T + bias


def _run_case(key, batch, channel, spectra_size, patch_size, dim_out, tol):
    patch_dim = channel * patch_size
    kx, kw, kb = jax.random.split(key, 3)
    x = jax.random.normal(kx, (batch, channel, spectra_size), dtype=jnp.float32)
    bound = 1.0 / (patch_dim ** 0.5)
    weight = jax.random.uniform(kw, (dim_out, patch_dim), jnp.float32, -bound, bound)
    bias = jax.random.uniform(kb, (dim_out,), jnp.float32, -bound, bound)

    y = patch_embedding(x, weight, bias, patch_size)
    y = jax.block_until_ready(y)

    y_ref = reference_patch_embedding(x, weight, bias, patch_size)
    assert y.shape == (batch, spectra_size // patch_size, dim_out)
    # bf16 matmul operands with f32 accumulation -> tolerance is bf16-scale.
    assert jnp.allclose(y, y_ref, atol=tol, rtol=tol), (
        float(jnp.max(jnp.abs(y - y_ref))))


if __name__ == "__main__":
    key = jax.random.PRNGKey(0)
    k1, k2 = jax.random.split(key)

    # Small shapes consistent with the module's forward pass (single-step grid).
    _run_case(k1, batch=2, channel=4, spectra_size=16, patch_size=4,
              dim_out=32, tol=2e-2)

    # Slightly longer spectra to exercise the tiled, multi-step pipelined path
    # (TD < D, several grid steps).
    _run_case(k2, batch=2, channel=4, spectra_size=512, patch_size=4,
              dim_out=32, tol=2e-2)

    print("KERNEL_OK")
</pallas_src>

<mosaic_0001>
module attributes {stable_mosaic.version = 11 : i64} {
  func.func @_patch_embed_kernel(%arg0: i32, %arg1: i32, %arg2: memref<1x4x4x4xf32, #tpu.memory_space<vmem>>, %arg3: memref<16x32xbf16, #tpu.memory_space<vmem>>, %arg4: memref<1x32xf32, #tpu.memory_space<vmem>>, %arg5: memref<1x4x32xf32, #tpu.memory_space<vmem>>) attributes {dimension_semantics = [#tpu.dimension_semantics<parallel>, #tpu.dimension_semantics<parallel>], iteration_bounds = array<i64: 2, 1>, scalar_prefetch = 0 : i64, scratch_operands = 0 : i64, tpu.core_type = #tpu.core_type<tc>, window_params = [{transform_indices = @transform_0, window_bounds = array<i64: 1, 4, 4, 4>}, {pipeline_mode = #tpu.pipeline_mode<synchronous>, transform_indices = @transform_1, window_bounds = array<i64: 16, 32>}, {pipeline_mode = #tpu.pipeline_mode<synchronous>, transform_indices = @transform_2, window_bounds = array<i64: 1, 32>}, {transform_indices = @transform_3, window_bounds = array<i64: 1, 4, 32>}]} {
    %c0 = arith.constant 0 : index
    %c0_0 = arith.constant 0 : index
    %c0_1 = arith.constant 0 : index
    %c0_2 = arith.constant 0 : index
    %0 = vector.load %arg2[%c0, %c0_0, %c0_1, %c0_2] : memref<1x4x4x4xf32, #tpu.memory_space<vmem>>, vector<1x1x4x4xf32>
    %1 = vector.shape_cast %0 : vector<1x1x4x4xf32> to vector<4x4xf32>
    %c0_3 = arith.constant 0 : index
    %c1 = arith.constant 1 : index
    %c0_4 = arith.constant 0 : index
    %c0_5 = arith.constant 0 : index
    %2 = vector.load %arg2[%c0_3, %c1, %c0_4, %c0_5] : memref<1x4x4x4xf32, #tpu.memory_space<vmem>>, vector<1x1x4x4xf32>
    %3 = vector.shape_cast %2 : vector<1x1x4x4xf32> to vector<4x4xf32>
    %c0_6 = arith.constant 0 : index
    %c2 = arith.constant 2 : index
    %c0_7 = arith.constant 0 : index
    %c0_8 = arith.constant 0 : index
    %4 = vector.load %arg2[%c0_6, %c2, %c0_7, %c0_8] : memref<1x4x4x4xf32, #tpu.memory_space<vmem>>, vector<1x1x4x4xf32>
    %5 = vector.shape_cast %4 : vector<1x1x4x4xf32> to vector<4x4xf32>
    %c0_9 = arith.constant 0 : index
    %c3 = arith.constant 3 : index
    %c0_10 = arith.constant 0 : index
    %c0_11 = arith.constant 0 : index
    %6 = vector.load %arg2[%c0_9, %c3, %c0_10, %c0_11] : memref<1x4x4x4xf32, #tpu.memory_space<vmem>>, vector<1x1x4x4xf32>
    %7 = vector.shape_cast %6 : vector<1x1x4x4xf32> to vector<4x4xf32>
    %8 = tpu.concatenate %1, %3, %5, %7 in 1 : vector<4x4xf32>, vector<4x4xf32>, vector<4x4xf32>, vector<4x4xf32> -> vector<4x16xf32>
    %9 = arith.truncf %8 : vector<4x16xf32> to vector<4x16xbf16>
    %c0_12 = arith.constant 0 : index
    %c0_13 = arith.constant 0 : index
    %10 = vector.load %arg3[%c0_12, %c0_13] : memref<16x32xbf16, #tpu.memory_space<vmem>>, vector<16x32xbf16>
    %cst = arith.constant dense<0.000000e+00> : vector<4x32xf32>
    %11 = tpu.matmul %9, %10, %cst {dimension_numbers = #tpu.dot_dimension_numbers<[1], [0], [0], [1], [0, 0, 1, 1], [], []>} : vector<4x16xbf16>, vector<16x32xbf16>, vector<4x32xf32> -> vector<4x32xf32>
    %c0_14 = arith.constant 0 : index
    %c0_15 = arith.constant 0 : index
    %12 = vector.load %arg4[%c0_14, %c0_15] : memref<1x32xf32, #tpu.memory_space<vmem>>, vector<1x32xf32>
    %13 = vector.broadcast %12 : vector<1x32xf32> to vector<4x32xf32>
    %14 = arith.addf %11, %13 : vector<4x32xf32>
    %c0_16 = arith.constant 0 : index
    %c0_17 = arith.constant 0 : index
    %c0_18 = arith.constant 0 : index
    %15 = vector.load %arg5[%c0_16, %c0_17, %c0_18] : memref<1x4x32xf32, #tpu.memory_space<vmem>>, vector<1x4x32xf32>
    %16 = vector.shape_cast %15 : vector<1x4x32xf32> to vector<4x32xf32>
    %17 = vector.shape_cast %14 : vector<4x32xf32> to vector<1x4x32xf32>
    tpu.vector_store %arg5[%c0_16, %c0_17, %c0_18], %17 {strides = array<i32>} : memref<1x4x32xf32, #tpu.memory_space<vmem>>, vector<1x4x32xf32>,
    return
  }
  func.func @transform_0(%arg0: i32, %arg1: i32) -> (i32, i32, i32, i32) {
    %c0_i32 = arith.constant 0 : i32
    %c0_i32_0 = arith.constant 0 : i32
    %c0_i32_1 = arith.constant 0 : i32
    return %arg0, %c0_i32, %arg1, %c0_i32_0 : i32, i32, i32, i32
  }
  func.func @transform_1(%arg0: i32, %arg1: i32) -> (i32, i32) {
    %c0_i32 = arith.constant 0 : i32
    %c0_i32_0 = arith.constant 0 : i32
    %c0_i32_1 = arith.constant 0 : i32
    return %c0_i32, %c0_i32_0 : i32, i32
  }
  func.func @transform_2(%arg0: i32, %arg1: i32) -> (i32, i32) {
    %c0_i32 = arith.constant 0 : i32
    %c0_i32_0 = arith.constant 0 : i32
    %c0_i32_1 = arith.constant 0 : i32
    return %c0_i32, %c0_i32_0 : i32, i32
  }
  func.func @transform_3(%arg0: i32, %arg1: i32) -> (i32, i32, i32) {
    %c0_i32 = arith.constant 0 : i32
    %c0_i32_0 = arith.constant 0 : i32
    return %arg0, %arg1, %c0_i32 : i32, i32, i32
  }
}

</mosaic_0001>

<llo_original>
// kernel: tpu_custom_call.1
$region0: #{tpu_custom_call.1}
  #allocation0 [shape = 'u32[]', space=smem, size = 0x4, offset = 0x4, fixed_abs, tag = 'smem constant byte address 0x4 - core index']
  #allocation1 [shape = 'u32[144,128]{1,0:T(1,128)}', space=vmem, size = 0x12000, scoped, tag = 'internal scratch']
  %s0 = inlined_call_operand.hbm [shape: f32[2,4,4,4], index: 0, kind: input, shape index: {}]
  %s1 = inlined_call_operand.hbm [shape: bf16[16,32], index: 1, kind: input, shape index: {}]
  %s2 = inlined_call_operand.vmem [shape: f32[1,32], index: 2, kind: input, shape index: {}]
  %s3 = inlined_call_operand.hbm [shape: f32[2,4,32], index: 3, kind: output, shape index: {}]
  %s4 = sld [smem:[#allocation0]]
  $region53: #{tpu_custom_call.1} parent=0
    _
  %s6 = ssub.s32 1, %s4
  %s7 = scalar_select 0, %s6, %s4
  $region1: #{tpu_custom_call.1} parent=0
    #allocation2 [shape = 'u8[16384]{0}', space=vmem, size = 0x4000, scoped, tag = 'input window, operand 0']
    #allocation3 [shape = 's32[2]{0}', space=sflag, size = 0x8, scoped, tag = 'scoped memory for tpu_custom_call.1']
    #allocation4 [shape = 's32[2]{0}', space=sflag, size = 0x8, scoped, tag = 'scoped memory for tpu_custom_call.1']
    #allocation5 [shape = 'u8[4096]{0}', space=vmem, size = 0x1000, scoped, tag = 'input window, operand 1, single buffered']
    #allocation6 [shape = 's32[1]{0}', space=sflag, size = 0x4, scoped, tag = 'scoped memory for tpu_custom_call.1']
    #allocation7 [shape = 'u8[4096]{0}', space=vmem, size = 0x1000, scoped, tag = 'output window, operand 0']
    %8 = vsyncpa [#allocation3], 0
    %s9 = scalar_lea.sflag [#allocation3], 1
    %10 = vsyncpa %s9, 0
    %11 = vsyncpa [#allocation6], 0
    %12 = vsyncpa [#allocation4], 0
    %s13 = scalar_lea.sflag [#allocation4], 1
    %14 = vsyncpa %s13, 0
    loop: start=0, step=1, limit=4
    $region2: #{tpu_custom_call.1} parent=1 // loop_pre_header
      _
    $region3: #{tpu_custom_call.1} parent=1 // loop_header
      %s16 = sphi 0, %s20
      %p17 = scmp.ge.s32.totalorder %s16, 4
      %s23 = sphi 0, %s35
      %s24 = sphi 0, %s31
      %s25 = sphi 0, %s23
      %s26 = sphi 0, %s24
      %s27 = sphi 0, %s25
      %s28 = sphi 0, %s26
      %s40 = sphi 0, %s42
      %s43 = sphi 0, %s40
      %s44 = sphi 0, %s43
      %s60 = sphi 0, %s44
      %s64 = sphi 0, %s64
      %s66 = sphi 0, %s64
      %s67 = sphi 0, %s66
      %s81 = sphi 0, %s67
      %s85 = sphi 0, %s85
      %s87 = sphi 0, %s85
      %s88 = sphi 0, %s87
      %s102 = sphi 0, %s88
      %s110 = sphi 0, %s112
      %s113 = sphi 0, %s110
      %s114 = sphi 0, %s113
      %s130 = sphi 0, %s114
    $region4: #{tpu_custom_call.1} parent=1 // loop_header_branch
      %19 = sbr.rel (%p17) target = $region8
    $region5: #{tpu_custom_call.1} parent=1 // loop_body
      %s21 = ssub.s32 %s16, 1
      %s22 = ssub.s32 %s16, 2
      %s29 = sadd.s32 1, %s24
      %p30 = scmp.ge.s32.totalorder %s29, 1
      %s31 = scalar_select %p30, 0, %s29
      %s32 = sadd.s32 1, %s23
      %s33 = scalar_select %p30, %s32, %s23
      %p34 = scmp.ge.s32.totalorder %s33, 2
      %s35 = scalar_select %p34, 0, %s33
      %s36 = ssub.s32 %s23, %s35
      %s37 = ssub.s32 %s24, %s31
      %s38 = sor.u32 %s36, %s37
      %p39 = scmp.eq.s32.totalorder %s38, 0
      %s41 = sadd.s32 %s40, 1
      %s42 = scalar_select %p39, %s40, %s41
      %p45 = pneg %p39
      %p46 = scmp.eq.s32.totalorder %s16, 1
      %p47 = por %p45, %p46
      %p48 = scmp.ne.s32.totalorder %s40, %s43
      %p49 = scmp.eq.s32.totalorder %s16, 0
      %p50 = por %p48, %p49
      %p51 = scmp.ne.s32.totalorder %s40, %s43
      %p52 = scmp.eq.s32.totalorder %s21, 1
      %p53 = por %p51, %p52
      %p54 = scmp.ne.s32.totalorder %s43, %s44
      %p55 = scmp.eq.s32.totalorder %s21, 0
      %p56 = por %p54, %p55
      %p57 = scmp.ne.s32.totalorder %s43, %s44
      %p58 = scmp.eq.s32.totalorder %s22, 1
      %p59 = por %p57, %p58
      %p61 = scmp.ne.s32.totalorder %s44, %s60
      %p62 = scmp.eq.s32.totalorder %s22, 0
      %p63 = por %p61, %p62
      %s65 = sadd.s32 %s64, 1
      %p68 = scmp.eq.s32.totalorder %s16, 1
      %p69 = scmp.ne.s32.totalorder %s64, %s66
      %p70 = scmp.eq.s32.totalorder %s16, 0
      %p71 = por %p69, %p70
      %p72 = scmp.ne.s32.totalorder %s64, %s66
      %p73 = scmp.eq.s32.totalorder %s21, 1
      %p74 = por %p72, %p73
      %p75 = scmp.ne.s32.totalorder %s66, %s67
      %p76 = scmp.eq.s32.totalorder %s21, 0
      %p77 = por %p75, %p76
      %p78 = scmp.ne.s32.totalorder %s66, %s67
      %p79 = scmp.eq.s32.totalorder %s22, 1
      %p80 = por %p78, %p79
      %p82 = scmp.ne.s32.totalorder %s67, %s81
      %p83 = scmp.eq.s32.totalorder %s22, 0
      %p84 = por %p82, %p83
      %s86 = sadd.s32 %s85, 1
      %p89 = scmp.eq.s32.totalorder %s16, 1
      %p90 = scmp.ne.s32.totalorder %s85, %s87
      %p91 = scmp.eq.s32.totalorder %s16, 0
      %p92 = por %p90, %p91
      %p93 = scmp.ne.s32.totalorder %s85, %s87
      %p94 = scmp.eq.s32.totalorder %s21, 1
      %p95 = por %p93, %p94
      %p96 = scmp.ne.s32.totalorder %s87, %s88
      %p97 = scmp.eq.s32.totalorder %s21, 0
      %p98 = por %p96, %p97
      %p99 = scmp.ne.s32.totalorder %s87, %s88
      %p100 = scmp.eq.s32.totalorder %s22, 1
      %p101 = por %p99, %p100
      %p103 = scmp.ne.s32.totalorder %s88, %s102
      %p104 = scmp.eq.s32.totalorder %s22, 0
      %p105 = por %p103, %p104
      %s106 = ssub.s32 %s23, %s35
      %s107 = ssub.s32 %s24, %s31
      %s108 = sor.u32 %s106, %s107
      %p109 = scmp.eq.s32.totalorder %s108, 0
      %s111 = sadd.s32 %s110, 1
      %s112 = scalar_select %p109, %s110, %s111
      %p115 = pneg %p109
      %p116 = scmp.eq.s32.totalorder %s16, 1
      %p117 = por %p115, %p116
      %p118 = scmp.ne.s32.totalorder %s110, %s113
      %p119 = scmp.eq.s32.totalorder %s16, 0
      %p120 = por %p118, %p119
      %p121 = scmp.ne.s32.totalorder %s110, %s113
      %p122 = scmp.eq.s32.totalorder %s21, 1
      %p123 = por %p121, %p122
      %p124 = scmp.ne.s32.totalorder %s113, %s114
      %p125 = scmp.eq.s32.totalorder %s21, 0
      %p126 = por %p124, %p125
      %p127 = scmp.ne.s32.totalorder %s113, %s114
      %p128 = scmp.eq.s32.totalorder %s22, 1
      %p129 = por %p127, %p128
      %p131 = scmp.ne.s32.totalorder %s114, %s130
      %p132 = scmp.eq.s32.totalorder %s22, 0
      %p133 = por %p131, %p132
      %p134 = scmp.le.s32.totalorder 1, %s16
      %p135 = scmp.lt.s32.totalorder %s16, 3
      %p136 = pnand %p134, %p135
      %p137 = pneg %p136
      // Predicated region
      $region9: #{tpu_custom_call.1} parent=5 // pred_check
        _
      $region10: #{tpu_custom_call.1} parent=5 // pred_check_branch
        %139 = sbr.rel (%p136) target = $region12
      $region11: #{tpu_custom_call.1} parent=5 // pred_region
        %s140 = ssub.s32 %s16, 1
        // Predicated region
        $region13: #{tpu_custom_call.1} parent=11 // pred_check
          %p141 = pneg %p77
        $region14: #{tpu_custom_call.1} parent=11 // pred_check_branch
          %143 = sbr.rel (%p141) target = $region16
        $region15: #{tpu_custom_call.1} parent=11 // pred_region
          %s145 = ssub.s32 128, 128
          %146 = vsyncadd [#allocation6], %s145
          %s147 = sshll.u32 [#allocation5], 4
          %s148 = int_to_ptr.vmem [resolvable:$true] %s147
          %153 = dma.hbm_to_vmem [thread:$0]  %s1, 128, %s148, [#allocation6], 64, 64, 4
        $region16: #{tpu_custom_call.1} parent=11 // pred_fallthru
          _
        // Predicated region
        $region17: #{tpu_custom_call.1} parent=11 // pred_check
          %p154 = pneg %p98
        $region18: #{tpu_custom_call.1} parent=11 // pred_check_branch
          %156 = sbr.rel (%p154) target = $region20
        $region19: #{tpu_custom_call.1} parent=11 // pred_region
          _
        $region20: #{tpu_custom_call.1} parent=11 // pred_fallthru
          _
      $region12: #{tpu_custom_call.1} parent=5 // pred_fallthru
        _
      %p157 = scmp.lt.s32.totalorder %s16, 2
      // Predicated region
      $region21: #{tpu_custom_call.1} parent=5 // pred_check
        %p158 = pneg %p157
      $region22: #{tpu_custom_call.1} parent=5 // pred_check_branch
        %160 = sbr.rel (%p158) target = $region24
      $region23: #{tpu_custom_call.1} parent=5 // pred_region
        // Predicated region
        $region25: #{tpu_custom_call.1} parent=23 // pred_check
          %p161 = pneg %p50
        $region26: #{tpu_custom_call.1} parent=23 // pred_check_branch
          %163 = sbr.rel (%p161) target = $region28
        $region27: #{tpu_custom_call.1} parent=23 // pred_region
          %s164 = sand.u32 %s40, 1
          %s165 = scalar_lea.sflag [#allocation3], %s164
          %s166 = sand.u32 %s40, 1
          %s167 = smul.addr %s166, 16
          %s168 = scalar_lea.vmem [#allocation2], %s167
          %s170 = ssub.s32 256, 256
          %171 = vsyncadd %s165, %s170
          %s172 = smul.addr %s23, 4
          %s173 = sadd.s32 %s24, %s172
          %s174 = smul.addr %s173, 64
          %s175 = scalar_lea.hbm %s0, %s174
          %s176 = sshll.u32 %s168, 4
          %s177 = int_to_ptr.vmem [resolvable:$true] %s176
          %182 = dma.hbm_to_vmem [thread:$0]  %s175, 256, %s177, %s165, 64, 64, 4
        $region28: #{tpu_custom_call.1} parent=23 // pred_fallthru
          _
      $region24: #{tpu_custom_call.1} parent=5 // pred_fallthru
        _
      %p183 = scmp.le.s32.totalorder 1, %s16
      %p184 = scmp.lt.s32.totalorder %s16, 3
      %p185 = pnand %p183, %p184
      %p186 = pneg %p185
      // Predicated region
      $region29: #{tpu_custom_call.1} parent=5 // pred_check
        _
      $region30: #{tpu_custom_call.1} parent=5 // pred_check_branch
        %188 = sbr.rel (%p185) target = $region32
      $region31: #{tpu_custom_call.1} parent=5 // pred_region
        %s189 = ssub.s32 %s16, 1
        %s190 = sand.u32 %s43, 1
        %s191 = scalar_lea.sflag [#allocation3], %s190
        %s192 = sand.u32 %s43, 1
        %s193 = smul.addr %s192, 16
        %s194 = scalar_lea.vmem [#allocation2], %s193
        // Predicated region
        $region33: #{tpu_custom_call.1} parent=31 // pred_check
          %p195 = pneg %p56
        $region34: #{tpu_custom_call.1} parent=31 // pred_check_branch
          %197 = sbr.rel (%p195) target = $region36
        $region35: #{tpu_custom_call.1} parent=31 // pred_region
          %198 = dma.done %s191, 256
        $region36: #{tpu_custom_call.1} parent=31 // pred_fallthru
          _
        // Predicated region
        $region37: #{tpu_custom_call.1} parent=31 // pred_check
          %p199 = pneg %p77
        $region38: #{tpu_custom_call.1} parent=31 // pred_check_branch
          %201 = sbr.rel (%p199) target = $region40
        $region39: #{tpu_custom_call.1} parent=31 // pred_region
          %202 = dma.done [#allocation6], 128
        $region40: #{tpu_custom_call.1} parent=31 // pred_fallthru
          _
        %s203 = sand.u32 %s43, 1
        %s204 = scalar_lea.sflag [#allocation3], %s203
        %s205 = sand.u32 %s43, 1
        %s206 = smul.addr %s205, 16
        %s207 = scalar_lea.vmem [#allocation2], %s206
        %p208 = pneg %p56
        %p209 = pneg %p53
        %p210 = pneg %p77
        %p211 = pneg %p74
        %p212 = pneg %p98
        %p213 = pneg %p95
        %p214 = pneg %p126
        %p215 = pneg %p123
        %s216 = sand.u32 %s113, 1
        %s217 = scalar_lea.sflag [#allocation4], %s216
        %s218 = sand.u32 %s113, 1
        %s219 = smul.addr %s218, 4
        %s220 = scalar_lea.vmem [#allocation7], %s219
        %v222 = vld [vmem:[%s194] sm:$0xf]
        %s223 = scalar_lea.vmem %s194, 4 [#allocation2]
        %v224 = vld [vmem:[%s223] sm:$0xf]
        %s225 = scalar_lea.vmem %s194, 8 [#allocation2]
        %v226 = vld [vmem:[%s225] sm:$0xf]
        %s227 = scalar_lea.vmem %s194, 12 [#allocation2]
        %v228 = vld [vmem:[%s227] sm:$0xf]
        %230 = vrot.lane.b32.xlu0 %v224, 4
        %v231 = vpop.permute.xlu0 %230
        %234 = vrot.lane.b32.xlu0 %v226, 8
        %v235 = vpop.permute.xlu0 %234
        %238 = vrot.lane.b32.xlu0 %v228, 12
        %v239 = vpop.permute.xlu0 %238
        %vm241 = vcmask 31744
        %v242 = vsel %vm241, %v222, %v231
        %vm243 = vcmask 64512
        %v244 = vsel %vm243, %v242, %v235
        %vm245 = vcmask 97280
        %v246 = vsel %vm245, %v244, %v239
        %v247 = vpack.c.bf16 %v246, %v246
        %v248 = vld [vmem:[#allocation5] sm:$0xf]
        %v249 = vld [vmem:[#allocation5 + $0x4] sm:$0xf]
        %v250 = vld [vmem:[%s2] sm:$0x1]
        %v252 = vlaneseq
        %v253 = vshrl.u32 %v252, 7
        %v254 = vsub.s32 0, %v253
        %v255 = vrot.slane %v250, %v254
        %v259 = vunpack.c.l.b16 %v248
        %v260 = vunpack.c.l.b16 %v249
        %v261 = vpack.c.b16 %v260, %v259
        %vm263 = vcmask 130048
        %v265 = vsel %vm263, %v247, 0
        %267 = vmatprep.subr.bf16.mxu0 0
        %268 = vmatpush1.bf16.msra.mxu0 %v261
        %269 = vmatprep.subr.bf16.mxu0 0
        %270 = vmatpush1.bf16.msra.mxu0 0
        %271 = vmatprep.subr.bf16.mxu0 0
        %272 = vmatpush1.bf16.msra.mxu0 0
        %273 = vmatprep.subr.bf16.mxu0 0
        %274 = vmatpush1.bf16.msra.mxu0 0
        %275 = vmatprep.subr.bf16.mxu0 0
        %276 = vmatpush1.bf16.msra.mxu0 0
        %277 = vmatprep.subr.bf16.mxu0 0
        %278 = vmatpush1.bf16.msra.mxu0 0
        %279 = vmatprep.subr.bf16.mxu0 0
        %280 = vmatpush1.bf16.msra.mxu0 0
        %281 = vmatprep.subr.bf16.mxu0 0
        %282 = vmatpush1.bf16.msra.mxu0 0
        %283 = vmatprep.subr.bf16.mxu0 0
        %284 = vmatpush1.bf16.msra.mxu0 0
        %285 = vmatprep.subr.bf16.mxu0 0
        %286 = vmatpush1.bf16.msra.mxu0 0
        %287 = vmatprep.subr.bf16.mxu0 0
        %288 = vmatpush1.bf16.msra.mxu0 0
        %289 = vmatprep.subr.bf16.mxu0 0
        %290 = vmatpush1.bf16.msra.mxu0 0
        %291 = vmatprep.subr.bf16.mxu0 0
        %292 = vmatpush1.bf16.msra.mxu0 0
        %293 = vmatprep.subr.bf16.mxu0 0
        %294 = vmatpush1.bf16.msra.mxu0 0
        %295 = vmatprep.subr.bf16.mxu0 0
        %296 = vmatpush1.bf16.msra.mxu0 0
        %297 = vmatprep.subr.bf16.mxu0 0
        %298 = vmatpush1.bf16.msra.mxu0 0
        %299 = vmatprep.mubr.bf16.mxu0 0
        %300 = vmatmul.mubr.bf16.gmra.mrb[0].mxu0 %v265
        %v301 = vpop.f32.mrb[0].mxu0
        %v302 = vadd.f32 %v255, %v301
        %v303 = vpop.f32.mrb[0].mxu0
        %v304 = vpop.f32.mrb[0].mxu0
        %v305 = vpop.f32.mrb[0].mxu0
        %306 = vdwg.mxu0
        %vm307 = vcmask 257024
        %308 = vst.msk [vmem:[%s220] sm:$0xf] %vm307, %v302
        %s309 = sand.u32 %s113, 1
        %s310 = scalar_lea.sflag [#allocation4], %s309
        %s311 = sand.u32 %s113, 1
        %s312 = smul.addr %s311, 4
        %s313 = scalar_lea.vmem [#allocation7], %s312
        // Predicated region
        $region41: #{tpu_custom_call.1} parent=31 // pred_check
          %p314 = pneg %p123
        $region42: #{tpu_custom_call.1} parent=31 // pred_check_branch
          %316 = sbr.rel (%p314) target = $region44
        $region43: #{tpu_custom_call.1} parent=31 // pred_region
          %s318 = ssub.s32 64, 64
          %319 = vsyncadd %s310, %s318
          %s320 = sadd.s32 %s26, %s25
          %s321 = smul.addr %s320, 64
          %s322 = scalar_lea.hbm %s3, %s321
          %s324 = sshll.u32 %s313, 4
          %s325 = int_to_ptr.vmem [resolvable:$true] %s324
          %327 = dma.vmem_to_hbm [thread:$0]  %s325, 64, %s322, %s310
        $region44: #{tpu_custom_call.1} parent=31 // pred_fallthru
          _
      $region32: #{tpu_custom_call.1} parent=5 // pred_fallthru
        _
      %p328 = scmp.le.s32.totalorder 2, %s16
      // Predicated region
      $region45: #{tpu_custom_call.1} parent=5 // pred_check
        %p329 = pneg %p328
      $region46: #{tpu_custom_call.1} parent=5 // pred_check_branch
        %331 = sbr.rel (%p329) target = $region48
      $region47: #{tpu_custom_call.1} parent=5 // pred_region
        %s332 = ssub.s32 %s16, 2
        // Predicated region
        $region49: #{tpu_custom_call.1} parent=47 // pred_check
          %p333 = pneg %p129
        $region50: #{tpu_custom_call.1} parent=47 // pred_check_branch
          %335 = sbr.rel (%p333) target = $region52
        $region51: #{tpu_custom_call.1} parent=47 // pred_region
          %s336 = sand.u32 %s114, 1
          %s337 = scalar_lea.sflag [#allocation4], %s336
          %s338 = sand.u32 %s114, 1
          %s339 = smul.addr %s338, 4
          %s340 = scalar_lea.vmem [#allocation7], %s339
          %341 = dma.done %s337, 64
        $region52: #{tpu_custom_call.1} parent=47 // pred_fallthru
          _
      $region48: #{tpu_custom_call.1} parent=5 // pred_fallthru
        _
    $region6: #{tpu_custom_call.1} parent=1 // loop_footer
      %s20 = sadd.s32 1, %s16
    $region7: #{tpu_custom_call.1} parent=1 // loop_footer_branch
      %15 = sbr.rel target = $region3
    $region8: #{tpu_custom_call.1} parent=1 // loop_exit
      _
    %342 = vsyncpa [#allocation3], 1
    %s343 = scalar_lea.sflag [#allocation3], 1
    %344 = vsyncpa %s343, 1
    %345 = vsyncpa [#allocation6], 1
    %346 = vsyncpa [#allocation4], 1
    %s347 = scalar_lea.sflag [#allocation4], 1
    %348 = vsyncpa %s347, 1

</llo_original>
